<compile_context>
chip_gen: v7x
topology: tpu7x:2x2x1
jax: 0.10.0
libtpu: 0.0.40
codegen_flags: <defaults>
</compile_context>

<pallas_src>
import functools

import jax
import jax.numpy as jnp
from jax.experimental import pallas as pl
from jax.experimental.pallas import tpu as pltpu


def _round_up(x: int, m: int) -> int:
    return ((x + m - 1) // m) * m


def _largest_h_chunk(hp: int, cap: int) -> int:
    """Largest multiple-of-128 divisor of hp (hp is a multiple of 128) <= cap.

    The H chunk must divide Hp exactly: a ragged reduction tile would feed
    garbage (out-of-bounds) W1 columns / W2 rows into the accumulator.
    """
    if hp <= cap:
        return hp
    m = hp // 128
    best = 1
    d = 1
    while d * d <= m:
        if m % d == 0:
            for c in (d, m // d):
                if c * 128 <= cap:
                    best = max(best, c)
        d += 1
    return best * 128


def _pad_to(a, shape, dtype):
    a = jnp.asarray(a).astype(dtype)
    if tuple(a.shape) == tuple(shape):
        return a
    out = jnp.zeros(shape, dtype)
    return out.at[tuple(slice(0, s) for s in a.shape)].set(a)


def prepare_params(fc1_weight, fc1_bias, fc2_weight, fc2_bias, *, use_bf16=True):
    """One-time conversion of PyTorch nn.Linear parameters to kernel layout.

    fc1_weight: (H, D), fc1_bias: (H,), fc2_weight: (C, H), fc2_bias: (C,).
    Weights are stored transposed ([in, out]) and zero-padded on H / C to
    multiples of 128 (exact through matmul + bias + ReLU; pad columns are
    sliced off after the kernel). Biases stay f32.
    """
    H, D = fc1_weight.shape
    C, H2 = fc2_weight.shape
    assert H2 == H, "fc2 input dim must match fc1 output dim"
    Hp = _round_up(H, 128)
    Cp = _round_up(C, 128)
    wdt = jnp.bfloat16 if use_bf16 else jnp.float32
    w1p = _pad_to(jnp.asarray(fc1_weight).T, (D, Hp), wdt)        # (D, Hp)
    b1p = _pad_to(jnp.asarray(fc1_bias).reshape(1, H), (1, Hp), jnp.float32)
    w2p = _pad_to(jnp.asarray(fc2_weight).T, (Hp, Cp), wdt)       # (Hp, Cp)
    b2p = _pad_to(jnp.asarray(fc2_bias).reshape(1, C), (1, Cp), jnp.float32)
    return w1p, b1p, w2p, b2p, C


def dnn_kernel(x_ref, w1_ref, b1_ref, w2_ref, b2_ref, o_ref, acc_ref):
    h = pl.program_id(1)

    @pl.when(h == 0)
    def _():
        acc_ref[...] = jnp.zeros_like(acc_ref)

    # fc1 chunk: (TM, D) @ (D, TH) on the MXU, f32 accumulation.
    a = jnp.dot(x_ref[...].astype(w1_ref.dtype), w1_ref[...],
                preferred_element_type=jnp.float32)
    a = jnp.maximum(a + b1_ref[...], 0.0)            # bias + ReLU in f32 (VPU)
    # fc2 partial: (TM, TH) @ (TH, Cp), accumulated into the f32 scratch.
    acc_ref[...] += jnp.dot(a.astype(w2_ref.dtype), w2_ref[...],
                            preferred_element_type=jnp.float32)

    @pl.when(h == pl.num_programs(1) - 1)
    def _():
        o_ref[...] = (acc_ref[...] + b2_ref[...]).astype(o_ref.dtype)


def _bspec(shape, index_map, mode=None):
    if mode is None:
        return pl.BlockSpec(shape, index_map)
    return pl.BlockSpec(shape, index_map, pipeline_mode=mode)


@functools.partial(jax.jit, static_argnames=("tm", "th", "single_buffer", "out_c"))
def _dnn_forward_impl(x, w1p, b1p, w2p, b2p, *, tm, th, single_buffer, out_c):
    B, D = x.shape
    Hp, Cp = w2p.shape
    nb = -(-B // tm)               # ragged last batch tile: Pallas masks OOB writes
    nh = Hp // th                  # th always divides Hp (see _largest_h_chunk)

    wsz = w1p.dtype.itemsize
    xsz = x.dtype.itemsize
    # Conservative (double-buffered) VMEM estimate to size vmem_limit_bytes.
    est = (2 * tm * D * xsz + 2 * D * th * wsz + 2 * th * 4
           + 2 * th * Cp * wsz + 2 * Cp * 4
           + 2 * tm * Cp * xsz + tm * Cp * 4 + tm * th * 4)
    vmem_limit = int(min(max(2 * est, 32 * 1024 * 1024), 64 * 1024 * 1024))

    # Blocks whose index never changes only need a single VMEM buffer.
    wt_mode = pl.Buffered(1) if (single_buffer and nh == 1) else None
    b2_mode = pl.Buffered(1) if single_buffer else None

    in_specs = [
        _bspec((tm, D), lambda i, h: (i, 0)),            # x: full-extent D, no pad
        _bspec((D, th), lambda i, h: (0, h), wt_mode),   # W1 chunk
        _bspec((1, th), lambda i, h: (0, h), wt_mode),   # b1 chunk (f32)
        _bspec((th, Cp), lambda i, h: (h, 0), wt_mode),  # W2 chunk
        _bspec((1, Cp), lambda i, h: (0, 0), b2_mode),   # b2 (f32), constant
    ]

    out = pl.pallas_call(
        dnn_kernel,
        out_shape=jax.ShapeDtypeStruct((B, Cp), x.dtype),
        grid=(nb, nh),
        in_specs=in_specs,
        out_specs=pl.BlockSpec((tm, Cp), lambda i, h: (i, 0)),
        scratch_shapes=[pltpu.VMEM((tm, Cp), jnp.float32)],
        compiler_params=pltpu.CompilerParams(
            # Batch tiles are independent (parallel -> shards across both TCs
            # on v7x); the H axis carries the accumulator (arbitrary, last).
            dimension_semantics=("parallel", "arbitrary"),
            vmem_limit_bytes=vmem_limit,
        ),
    )(x, w1p, b1p, w2p, b2p)

    # TODO(synk): for very large input_size, add a D-reduction grid axis with a
    # pre-ReLU f32 accumulator so the x / W1 blocks also stay within VMEM.
    return out if out_c == Cp else out[:, :out_c]


_SINGLE_BUFFER_STATE = {"ok": None}  # None = unprobed; True/False after first call


def dnn_forward(x, params, *, tm=512, h_chunk_cap=2048):
    """relu(x @ W1.T + b1) @ W2.T + b2 with params from prepare_params()."""
    w1p, b1p, w2p, b2p, num_classes = params
    B, D = x.shape
    assert w1p.shape[0] == D, "x feature dim does not match fc1 input size"
    Hp = w1p.shape[1]
    TM = min(_round_up(tm, 8), _round_up(B, 8))
    TH = _largest_h_chunk(Hp, h_chunk_cap)

    state = _SINGLE_BUFFER_STATE
    if state["ok"] is None:
        try:
            out = _dnn_forward_impl(x, w1p, b1p, w2p, b2p, tm=TM, th=TH,
                                    single_buffer=True, out_c=num_classes)
            jax.block_until_ready(out)  # surface async failures before caching
            state["ok"] = True
            return out
        except Exception:
            # pipeline_mode=pl.Buffered(1) not supported on this build; fall back.
            state["ok"] = False
    if state["ok"]:
        return _dnn_forward_impl(x, w1p, b1p, w2p, b2p, tm=TM, th=TH,
                                 single_buffer=True, out_c=num_classes)
    return _dnn_forward_impl(x, w1p, b1p, w2p, b2p, tm=TM, th=TH,
                             single_buffer=False, out_c=num_classes)


if __name__ == "__main__":
    # Small shapes consistent with DNN(input_size, num_classes, HIDDEN_UNITS)
    batch = 8
    input_size = 32
    hidden_units = 64
    num_classes = 16

    key = jax.random.PRNGKey(0)
    kx, kw1, kb1, kw2, kb2 = jax.random.split(key, 5)

    x = jax.random.normal(kx, (batch, input_size), dtype=jnp.float32)
    # PyTorch nn.Linear layouts: fc1.weight (H, D), fc1.bias (H,),
    #                            fc2.weight (C, H), fc2.bias (C,)
    fc1_w = jax.random.normal(kw1, (hidden_units, input_size), jnp.float32) * 0.1
    fc1_b = jax.random.normal(kb1, (hidden_units,), jnp.float32) * 0.1
    fc2_w = jax.random.normal(kw2, (num_classes, hidden_units), jnp.float32) * 0.1
    fc2_b = jax.random.normal(kb2, (num_classes,), jnp.float32) * 0.1

    # Pure-JAX reference matching torch semantics: relu(x @ W1.T + b1) @ W2.T + b2
    y_ref = jnp.maximum(x @ fc1_w.T + fc1_b, 0.0) @ fc2_w.T + fc2_b

    # f32 weights path (tight tolerance).
    params_f32 = prepare_params(fc1_w, fc1_b, fc2_w, fc2_b, use_bf16=False)
    y32 = dnn_forward(x, params_f32)
    jax.block_until_ready(y32)
    assert y32.shape == (batch, num_classes)
    assert jnp.allclose(y32, y_ref, atol=1e-5, rtol=1e-5), "f32 mismatch vs reference"

    # bf16 weights path (default: halves HBM/VMEM weight traffic; f32 accumulation).
    params_bf16 = prepare_params(fc1_w, fc1_b, fc2_w, fc2_b, use_bf16=True)
    y16 = dnn_forward(x, params_bf16)
    jax.block_until_ready(y16)
    assert y16.shape == (batch, num_classes)
    assert jnp.allclose(y16, y_ref, atol=3e-2, rtol=3e-2), "bf16 mismatch vs reference"

    print("KERNEL_OK")
</pallas_src>

<mosaic_0001>
module attributes {stable_mosaic.version = 11 : i64} {
  func.func @dnn_kernel(%arg0: i32, %arg1: i32, %arg2: memref<8x32xf32, #tpu.memory_space<vmem>>, %arg3: memref<32x128xf32, #tpu.memory_space<vmem>>, %arg4: memref<1x128xf32, #tpu.memory_space<vmem>>, %arg5: memref<128x128xf32, #tpu.memory_space<vmem>>, %arg6: memref<1x128xf32, #tpu.memory_space<vmem>>, %arg7: memref<8x128xf32, #tpu.memory_space<vmem>>, %arg8: memref<8x128xf32, #tpu.memory_space<vmem>>) attributes {dimension_semantics = [#tpu.dimension_semantics<parallel>, #tpu.dimension_semantics<arbitrary>], iteration_bounds = array<i64: 1, 1>, scalar_prefetch = 0 : i64, scratch_operands = 1 : i64, tpu.core_type = #tpu.core_type<tc>, window_params = [{transform_indices = @transform_0, window_bounds = array<i64: 8, 32>}, {pipeline_mode = #tpu.pipeline_mode<synchronous>, transform_indices = @transform_1, window_bounds = array<i64: 32, 128>}, {pipeline_mode = #tpu.pipeline_mode<synchronous>, transform_indices = @transform_2, window_bounds = array<i64: 1, 128>}, {pipeline_mode = #tpu.pipeline_mode<synchronous>, transform_indices = @transform_3, window_bounds = array<i64: 128, 128>}, {pipeline_mode = #tpu.pipeline_mode<synchronous>, transform_indices = @transform_4, window_bounds = array<i64: 1, 128>}, {transform_indices = @transform_5, window_bounds = array<i64: 8, 128>}]} {
    %c0_i32 = arith.constant 0 : i32
    %0 = arith.cmpi eq, %arg1, %c0_i32 : i32
    %1 = arith.extui %0 : i1 to i32
    %c0_i32_0 = arith.constant 0 : i32
    %2 = arith.cmpi ne, %1, %c0_i32_0 : i32
    scf.if %2 {
      %cst_16 = arith.constant 0.000000e+00 : f32
      %19 = vector.broadcast %cst_16 : f32 to vector<8x128xf32>
      %c0_17 = arith.constant 0 : index
      %c0_18 = arith.constant 0 : index
      %20 = vector.load %arg8[%c0_17, %c0_18] : memref<8x128xf32, #tpu.memory_space<vmem>>, vector<8x128xf32>
      tpu.vector_store %arg8[%c0_17, %c0_18], %19 {strides = array<i32>} : memref<8x128xf32, #tpu.memory_space<vmem>>, vector<8x128xf32>,
    } else {
    }
    %c0 = arith.constant 0 : index
    %c0_1 = arith.constant 0 : index
    %3 = vector.load %arg2[%c0, %c0_1] : memref<8x32xf32, #tpu.memory_space<vmem>>, vector<8x32xf32>
    %c0_2 = arith.constant 0 : index
    %c0_3 = arith.constant 0 : index
    %4 = vector.load %arg3[%c0_2, %c0_3] : memref<32x128xf32, #tpu.memory_space<vmem>>, vector<32x128xf32>
    %cst = arith.constant dense<0.000000e+00> : vector<8x128xf32>
    %5 = tpu.matmul %3, %4, %cst {dimension_numbers = #tpu.dot_dimension_numbers<[1], [0], [0], [1], [0, 0, 1, 1], [], []>} : vector<8x32xf32>, vector<32x128xf32>, vector<8x128xf32> -> vector<8x128xf32>
    %c0_4 = arith.constant 0 : index
    %c0_5 = arith.constant 0 : index
    %6 = vector.load %arg4[%c0_4, %c0_5] : memref<1x128xf32, #tpu.memory_space<vmem>>, vector<1x128xf32>
    %7 = vector.broadcast %6 : vector<1x128xf32> to vector<8x128xf32>
    %8 = arith.addf %5, %7 : vector<8x128xf32>
    %cst_6 = arith.constant 0.000000e+00 : f32
    %9 = vector.broadcast %cst_6 : f32 to vector<8x128xf32>
    %10 = arith.maximumf %8, %9 : vector<8x128xf32>
    %c0_7 = arith.constant 0 : index
    %c0_8 = arith.constant 0 : index
    %11 = vector.load %arg8[%c0_7, %c0_8] : memref<8x128xf32, #tpu.memory_space<vmem>>, vector<8x128xf32>
    %c0_9 = arith.constant 0 : index
    %c0_10 = arith.constant 0 : index
    %12 = vector.load %arg5[%c0_9, %c0_10] : memref<128x128xf32, #tpu.memory_space<vmem>>, vector<128x128xf32>
    %cst_11 = arith.constant dense<0.000000e+00> : vector<8x128xf32>
    %13 = tpu.matmul %10, %12, %cst_11 {dimension_numbers = #tpu.dot_dimension_numbers<[1], [0], [0], [1], [0, 0, 1, 1], [], []>} : vector<8x128xf32>, vector<128x128xf32>, vector<8x128xf32> -> vector<8x128xf32>
    %14 = arith.addf %11, %13 : vector<8x128xf32>
    %c0_12 = arith.constant 0 : index
    %c0_13 = arith.constant 0 : index
    %15 = vector.load %arg8[%c0_12, %c0_13] : memref<8x128xf32, #tpu.memory_space<vmem>>, vector<8x128xf32>
    tpu.vector_store %arg8[%c0_12, %c0_13], %14 {strides = array<i32>} : memref<8x128xf32, #tpu.memory_space<vmem>>, vector<8x128xf32>,
    %c0_i32_14 = arith.constant 0 : i32
    %16 = arith.cmpi eq, %arg1, %c0_i32_14 : i32
    %17 = arith.extui %16 : i1 to i32
    %c0_i32_15 = arith.constant 0 : i32
    %18 = arith.cmpi ne, %17, %c0_i32_15 : i32
    scf.if %18 {
      %c0_16 = arith.constant 0 : index
      %c0_17 = arith.constant 0 : index
      %19 = vector.load %arg8[%c0_16, %c0_17] : memref<8x128xf32, #tpu.memory_space<vmem>>, vector<8x128xf32>
      %c0_18 = arith.constant 0 : index
      %c0_19 = arith.constant 0 : index
      %20 = vector.load %arg6[%c0_18, %c0_19] : memref<1x128xf32, #tpu.memory_space<vmem>>, vector<1x128xf32>
      %21 = vector.broadcast %20 : vector<1x128xf32> to vector<8x128xf32>
      %22 = arith.addf %19, %21 : vector<8x128xf32>
      %c0_20 = arith.constant 0 : index
      %c0_21 = arith.constant 0 : index
      %23 = vector.load %arg7[%c0_20, %c0_21] : memref<8x128xf32, #tpu.memory_space<vmem>>, vector<8x128xf32>
      tpu.vector_store %arg7[%c0_20, %c0_21], %22 {strides = array<i32>} : memref<8x128xf32, #tpu.memory_space<vmem>>, vector<8x128xf32>,
    } else {
    }
    return
  }
  func.func @transform_0(%arg0: i32, %arg1: i32) -> (i32, i32) {
    %c0_i32 = arith.constant 0 : i32
    %c0_i32_0 = arith.constant 0 : i32
    return %arg0, %c0_i32 : i32, i32
  }
  func.func @transform_1(%arg0: i32, %arg1: i32) -> (i32, i32) {
    %c0_i32 = arith.constant 0 : i32
    %c0_i32_0 = arith.constant 0 : i32
    return %c0_i32, %arg1 : i32, i32
  }
  func.func @transform_2(%arg0: i32, %arg1: i32) -> (i32, i32) {
    %c0_i32 = arith.constant 0 : i32
    %c0_i32_0 = arith.constant 0 : i32
    return %c0_i32, %arg1 : i32, i32
  }
  func.func @transform_3(%arg0: i32, %arg1: i32) -> (i32, i32) {
    %c0_i32 = arith.constant 0 : i32
    %c0_i32_0 = arith.constant 0 : i32
    return %arg1, %c0_i32 : i32, i32
  }
  func.func @transform_4(%arg0: i32, %arg1: i32) -> (i32, i32) {
    %c0_i32 = arith.constant 0 : i32
    %c0_i32_0 = arith.constant 0 : i32
    %c0_i32_1 = arith.constant 0 : i32
    return %c0_i32, %c0_i32_0 : i32, i32
  }
  func.func @transform_5(%arg0: i32, %arg1: i32) -> (i32, i32) {
    %c0_i32 = arith.constant 0 : i32
    %c0_i32_0 = arith.constant 0 : i32
    return %arg0, %c0_i32 : i32, i32
  }
}

module attributes {stable_mosaic.version = 11 : i64} {
  func.func @dnn_kernel(%arg0: i32, %arg1: i32, %arg2: memref<8x32xf32, #tpu.memory_space<vmem>>, %arg3: memref<32x128xf32, #tpu.memory_space<vmem>>, %arg4: memref<1x128xf32, #tpu.memory_space<vmem>>, %arg5: memref<128x128xf32, #tpu.memory_space<vmem>>, %arg6: memref<1x128xf32, #tpu.memory_space<vmem>>, %arg7: memref<8x128xf32, #tpu.memory_space<vmem>>, %arg8: memref<8x128xf32, #tpu.memory_space<vmem>>) attributes {dimension_semantics = [#tpu.dimension_semantics<parallel>, #tpu.dimension_semantics<arbitrary>], iteration_bounds = array<i64: 1, 1>, scalar_prefetch = 0 : i64, scratch_operands = 1 : i64, tpu.core_type = #tpu.core_type<tc>, window_params = [{transform_indices = @transform_0, window_bounds = array<i64: 8, 32>}, {transform_indices = @transform_1, window_bounds = array<i64: 32, 128>}, {transform_indices = @transform_2, window_bounds = array<i64: 1, 128>}, {transform_indices = @transform_3, window_bounds = array<i64: 128, 128>}, {pipeline_mode = #tpu.pipeline_mode<synchronous>, transform_indices = @transform_4, window_bounds = array<i64: 1, 128>}, {transform_indices = @transform_5, window_bounds = array<i64: 8, 128>}]} {
    %c0_i32 = arith.constant 0 : i32
    %0 = arith.cmpi eq, %arg1, %c0_i32 : i32
    %1 = arith.extui %0 : i1 to i32
    %c0_i32_0 = arith.constant 0 : i32
    %2 = arith.cmpi ne, %1, %c0_i32_0 : i32
    scf.if %2 {
      %cst_16 = arith.constant 0.000000e+00 : f32
      %19 = vector.broadcast %cst_16 : f32 to vector<8x128xf32>
      %c0_17 = arith.constant 0 : index
      %c0_18 = arith.constant 0 : index
      %20 = vector.load %arg8[%c0_17, %c0_18] : memref<8x128xf32, #tpu.memory_space<vmem>>, vector<8x128xf32>
      tpu.vector_store %arg8[%c0_17, %c0_18], %19 {strides = array<i32>} : memref<8x128xf32, #tpu.memory_space<vmem>>, vector<8x128xf32>,
    } else {
    }
    %c0 = arith.constant 0 : index
    %c0_1 = arith.constant 0 : index
    %3 = vector.load %arg2[%c0, %c0_1] : memref<8x32xf32, #tpu.memory_space<vmem>>, vector<8x32xf32>
    %c0_2 = arith.constant 0 : index
    %c0_3 = arith.constant 0 : index
    %4 = vector.load %arg3[%c0_2, %c0_3] : memref<32x128xf32, #tpu.memory_space<vmem>>, vector<32x128xf32>
    %cst = arith.constant dense<0.000000e+00> : vector<8x128xf32>
    %5 = tpu.matmul %3, %4, %cst {dimension_numbers = #tpu.dot_dimension_numbers<[1], [0], [0], [1], [0, 0, 1, 1], [], []>} : vector<8x32xf32>, vector<32x128xf32>, vector<8x128xf32> -> vector<8x128xf32>
    %c0_4 = arith.constant 0 : index
    %c0_5 = arith.constant 0 : index
    %6 = vector.load %arg4[%c0_4, %c0_5] : memref<1x128xf32, #tpu.memory_space<vmem>>, vector<1x128xf32>
    %7 = vector.broadcast %6 : vector<1x128xf32> to vector<8x128xf32>
    %8 = arith.addf %5, %7 : vector<8x128xf32>
    %cst_6 = arith.constant 0.000000e+00 : f32
    %9 = vector.broadcast %cst_6 : f32 to vector<8x128xf32>
    %10 = arith.maximumf %8, %9 : vector<8x128xf32>
    %c0_7 = arith.constant 0 : index
    %c0_8 = arith.constant 0 : index
    %11 = vector.load %arg8[%c0_7, %c0_8] : memref<8x128xf32, #tpu.memory_space<vmem>>, vector<8x128xf32>
    %c0_9 = arith.constant 0 : index
    %c0_10 = arith.constant 0 : index
    %12 = vector.load %arg5[%c0_9, %c0_10] : memref<128x128xf32, #tpu.memory_space<vmem>>, vector<128x128xf32>
    %cst_11 = arith.constant dense<0.000000e+00> : vector<8x128xf32>
    %13 = tpu.matmul %10, %12, %cst_11 {dimension_numbers = #tpu.dot_dimension_numbers<[1], [0], [0], [1], [0, 0, 1, 1], [], []>} : vector<8x128xf32>, vector<128x128xf32>, vector<8x128xf32> -> vector<8x128xf32>
    %14 = arith.addf %11, %13 : vector<8x128xf32>
    %c0_12 = arith.constant 0 : index
    %c0_13 = arith.constant 0 : index
    %15 = vector.load %arg8[%c0_12, %c0_13] : memref<8x128xf32, #tpu.memory_space<vmem>>, vector<8x128xf32>
    tpu.vector_store %arg8[%c0_12, %c0_13], %14 {strides = array<i32>} : memref<8x128xf32, #tpu.memory_space<vmem>>, vector<8x128xf32>,
    %c0_i32_14 = arith.constant 0 : i32
    %16 = arith.cmpi eq, %arg1, %c0_i32_14 : i32
    %17 = arith.extui %16 : i1 to i32
    %c0_i32_15 = arith.constant 0 : i32
    %18 = arith.cmpi ne, %17, %c0_i32_15 : i32
    scf.if %18 {
      %c0_16 = arith.constant 0 : index
      %c0_17 = arith.constant 0 : index
      %19 = vector.load %arg8[%c0_16, %c0_17] : memref<8x128xf32, #tpu.memory_space<vmem>>, vector<8x128xf32>
      %c0_18 = arith.constant 0 : index
      %c0_19 = arith.constant 0 : index
      %20 = vector.load %arg6[%c0_18, %c0_19] : memref<1x128xf32, #tpu.memory_space<vmem>>, vector<1x128xf32>
      %21 = vector.broadcast %20 : vector<1x128xf32> to vector<8x128xf32>
      %22 = arith.addf %19, %21 : vector<8x128xf32>
      %c0_20 = arith.constant 0 : index
      %c0_21 = arith.constant 0 : index
      %23 = vector.load %arg7[%c0_20, %c0_21] : memref<8x128xf32, #tpu.memory_space<vmem>>, vector<8x128xf32>
      tpu.vector_store %arg7[%c0_20, %c0_21], %22 {strides = array<i32>} : memref<8x128xf32, #tpu.memory_space<vmem>>, vector<8x128xf32>,
    } else {
    }
    return
  }
  func.func @transform_0(%arg0: i32, %arg1: i32) -> (i32, i32) {
    %c0_i32 = arith.constant 0 : i32
    %c0_i32_0 = arith.constant 0 : i32
    return %arg0, %c0_i32 : i32, i32
  }
  func.func @transform_1(%arg0: i32, %arg1: i32) -> (i32, i32) {
    %c0_i32 = arith.constant 0 : i32
    %c0_i32_0 = arith.constant 0 : i32
    return %c0_i32, %arg1 : i32, i32
  }
  func.func @transform_2(%arg0: i32, %arg1: i32) -> (i32, i32) {
    %c0_i32 = arith.constant 0 : i32
    %c0_i32_0 = arith.constant 0 : i32
    return %c0_i32, %arg1 : i32, i32
  }
  func.func @transform_3(%arg0: i32, %arg1: i32) -> (i32, i32) {
    %c0_i32 = arith.constant 0 : i32
    %c0_i32_0 = arith.constant 0 : i32
    return %arg1, %c0_i32 : i32, i32
  }
  func.func @transform_4(%arg0: i32, %arg1: i32) -> (i32, i32) {
    %c0_i32 = arith.constant 0 : i32
    %c0_i32_0 = arith.constant 0 : i32
    %c0_i32_1 = arith.constant 0 : i32
    return %c0_i32, %c0_i32_0 : i32, i32
  }
  func.func @transform_5(%arg0: i32, %arg1: i32) -> (i32, i32) {
    %c0_i32 = arith.constant 0 : i32
    %c0_i32_0 = arith.constant 0 : i32
    return %arg0, %c0_i32 : i32, i32
  }
}

</mosaic_0001>

<llo_original>
// kernel: _dnn_forward_impl.1
$region0: #{_dnn_forward_impl.1}
  #allocation0 [shape = 'u32[]', space=smem, size = 0x4, offset = 0x4, fixed_abs, tag = 'smem constant byte address 0x4 - core index']
  #allocation1 [shape = 'u32[144,128]{1,0:T(1,128)}', space=vmem, size = 0x12000, scoped, tag = 'internal scratch']
  #allocation2 [shape = 'f32[8,128]{1,0:T(8,128)}', space=vmem, size = 0x1000, scoped, tag = 'scratch operand']
  %s0 = inlined_call_operand.hbm [shape: f32[8,32], index: 0, kind: input, shape index: {}]
  %s1 = inlined_call_operand.hbm [shape: f32[32,128], index: 1, kind: input, shape index: {}]
  %s2 = inlined_call_operand.vmem [shape: f32[1,128], index: 2, kind: input, shape index: {}]
  %s3 = inlined_call_operand.hbm [shape: f32[128,128], index: 3, kind: input, shape index: {}]
  %s4 = inlined_call_operand.vmem [shape: f32[1,128], index: 4, kind: input, shape index: {}]
  %s5 = inlined_call_operand.hbm [shape: f32[8,128], index: 5, kind: output, shape index: {}]
  %s6 = sld [smem:[#allocation0]]
  $region50: #{_dnn_forward_impl.1} parent=0
    _
  %s8 = ssub.s32 1, %s6
  %s9 = scalar_select 0, %s8, %s6
  $region1: #{_dnn_forward_impl.1} parent=0
    #allocation3 [shape = 'u8[4096]{0}', space=vmem, size = 0x1000, scoped, tag = 'input window, operand 0, single buffered']
    #allocation4 [shape = 's32[1]{0}', space=sflag, size = 0x4, scoped, tag = 'scoped memory for _dnn_forward_impl.1']
    #allocation5 [shape = 's32[1]{0}', space=sflag, size = 0x4, scoped, tag = 'scoped memory for _dnn_forward_impl.1']
    #allocation6 [shape = 'u8[16384]{0}', space=vmem, size = 0x4000, scoped, tag = 'input window, operand 1, single buffered']
    #allocation7 [shape = 's32[1]{0}', space=sflag, size = 0x4, scoped, tag = 'scoped memory for _dnn_forward_impl.1']
    #allocation8 [shape = 'u8[65536]{0}', space=vmem, size = 0x10000, scoped, tag = 'input window, operand 3, single buffered']
    #allocation9 [shape = 'u8[4096]{0}', space=vmem, size = 0x1000, scoped, tag = 'output window, operand 0, single buffered']
    %10 = vsyncpa [#allocation4], 0
    %11 = vsyncpa [#allocation7], 0
    %12 = vsyncpa [#allocation5], 0
    // Predicated region
    $region2: #{_dnn_forward_impl.1} parent=1 // pred_check
      _
    $region3: #{_dnn_forward_impl.1} parent=1 // pred_check_branch
      %14 = sbr.rel (0) target = $region5
    $region4: #{_dnn_forward_impl.1} parent=1 // pred_region
      %s16 = ssub.s32 128, 128
      %17 = vsyncadd [#allocation4], %s16
      %s19 = sshll.u32 [#allocation3], 4
      %s20 = int_to_ptr.vmem [resolvable:$true] %s19
      %22 = dma.hbm_to_vmem [thread:$0]  %s0, 128, %s20, [#allocation4]
    $region5: #{_dnn_forward_impl.1} parent=1 // pred_fallthru
      _
    // Predicated region
    $region6: #{_dnn_forward_impl.1} parent=1 // pred_check
      _
    $region7: #{_dnn_forward_impl.1} parent=1 // pred_check_branch
      %24 = sbr.rel (0) target = $region9
    $region8: #{_dnn_forward_impl.1} parent=1 // pred_region
      %s26 = ssub.s32 512, 512
      %27 = vsyncadd [#allocation7], %s26
      %s28 = sshll.u32 [#allocation6], 4
      %s29 = int_to_ptr.vmem [resolvable:$true] %s28
      %34 = dma.hbm_to_vmem [thread:$0]  %s1, 512, %s29, [#allocation7], 128, 128, 8
    $region9: #{_dnn_forward_impl.1} parent=1 // pred_fallthru
      _
    // Predicated region
    $region10: #{_dnn_forward_impl.1} parent=1 // pred_check
      _
    $region11: #{_dnn_forward_impl.1} parent=1 // pred_check_branch
      %36 = sbr.rel (0) target = $region13
    $region12: #{_dnn_forward_impl.1} parent=1 // pred_region
      _
    $region13: #{_dnn_forward_impl.1} parent=1 // pred_fallthru
      _
    // Predicated region
    $region14: #{_dnn_forward_impl.1} parent=1 // pred_check
      _
    $region15: #{_dnn_forward_impl.1} parent=1 // pred_check_branch
      %38 = sbr.rel (0) target = $region17
    $region16: #{_dnn_forward_impl.1} parent=1 // pred_region
      %s40 = ssub.s32 2048, 2048
      %41 = vsyncadd [#allocation7], %s40
      %s42 = sshll.u32 [#allocation8], 4
      %s43 = int_to_ptr.vmem [resolvable:$true] %s42
      %48 = dma.hbm_to_vmem [thread:$0]  %s3, 2048, %s43, [#allocation7], 128, 128, 8
    $region17: #{_dnn_forward_impl.1} parent=1 // pred_fallthru
      _
    // Predicated region
    $region18: #{_dnn_forward_impl.1} parent=1 // pred_check
      _
    $region19: #{_dnn_forward_impl.1} parent=1 // pred_check_branch
      %50 = sbr.rel (0) target = $region21
    $region20: #{_dnn_forward_impl.1} parent=1 // pred_region
      _
    $region21: #{_dnn_forward_impl.1} parent=1 // pred_fallthru
      _
    // Predicated region
    $region22: #{_dnn_forward_impl.1} parent=1 // pred_check
      _
    $region23: #{_dnn_forward_impl.1} parent=1 // pred_check_branch
      %52 = sbr.rel (0) target = $region25
    $region24: #{_dnn_forward_impl.1} parent=1 // pred_region
      %53 = dma.done [#allocation4], 128
    $region25: #{_dnn_forward_impl.1} parent=1 // pred_fallthru
      _
    // Predicated region
    $region26: #{_dnn_forward_impl.1} parent=1 // pred_check
      _
    $region27: #{_dnn_forward_impl.1} parent=1 // pred_check_branch
      %55 = sbr.rel (0) target = $region29
    $region28: #{_dnn_forward_impl.1} parent=1 // pred_region
      %56 = dma.done [#allocation7], 512
    $region29: #{_dnn_forward_impl.1} parent=1 // pred_fallthru
      _
    // Predicated region
    $region30: #{_dnn_forward_impl.1} parent=1 // pred_check
      _
    $region31: #{_dnn_forward_impl.1} parent=1 // pred_check_branch
      %58 = sbr.rel (0) target = $region33
    $region32: #{_dnn_forward_impl.1} parent=1 // pred_region
      %59 = dma.done [#allocation7], 2048
    $region33: #{_dnn_forward_impl.1} parent=1 // pred_fallthru
      _
    %p60 = scmp.eq.s32.totalorder 0, 0
    // Predicated region
    $region34: #{_dnn_forward_impl.1} parent=1 // pred_check
      %p61 = pneg %p60
    $region35: #{_dnn_forward_impl.1} parent=1 // pred_check_branch
      %63 = sbr.rel (%p61) target = $region37
    $region36: #{_dnn_forward_impl.1} parent=1 // pred_region
      %64 = vst [vmem:[#allocation2] sm:$0xff] 0.0
    $region37: #{_dnn_forward_impl.1} parent=1 // pred_fallthru
      _
    %v65 = vld [vmem:[#allocation3] sm:$0xff]
    %v66 = vld [vmem:[#allocation6] sm:$0xff]
    %v67 = vld [vmem:[#allocation6 + $0x8] sm:$0xff]
    %v68 = vld [vmem:[#allocation6 + $0x10] sm:$0xff]
    %v69 = vld [vmem:[#allocation6 + $0x18] sm:$0xff]
    %v70 = vld [vmem:[%s2] sm:$0x1]
    %v72 = vlaneseq
    %v73 = vshrl.u32 %v72, 7
    %v74 = vsub.s32 0, %v73
    %v75 = vrot.slane %v70, %v74
    %vm77 = vcmask 261120
    %v79 = vsel %vm77, %v65, 0
    %81 = vmatprep.subr.mxu0 0.0
    %82 = vmatpush1.msra.mxu0 %v66
    %83 = vmatprep.subr.mxu0 0.0
    %84 = vmatpush1.msra.mxu0 %v67
    %85 = vmatprep.subr.mxu0 0.0
    %86 = vmatpush1.msra.mxu0 %v68
    %87 = vmatprep.subr.mxu0 0.0
    %88 = vmatpush1.msra.mxu0 %v69
    %89 = vmatprep.subr.mxu0 0.0
    %90 = vmatpush1.msra.mxu0 0.0
    %91 = vmatprep.subr.mxu0 0.0
    %92 = vmatpush1.msra.mxu0 0.0
    %93 = vmatprep.subr.mxu0 0.0
    %94 = vmatpush1.msra.mxu0 0.0
    %95 = vmatprep.subr.mxu0 0.0
    %96 = vmatpush1.msra.mxu0 0.0
    %97 = vmatprep.subr.mxu0 0.0
    %98 = vmatpush1.msra.mxu0 0.0
    %99 = vmatprep.subr.mxu0 0.0
    %100 = vmatpush1.msra.mxu0 0.0
    %101 = vmatprep.subr.mxu0 0.0
    %102 = vmatpush1.msra.mxu0 0.0
    %103 = vmatprep.subr.mxu0 0.0
    %104 = vmatpush1.msra.mxu0 0.0
    %105 = vmatprep.subr.mxu0 0.0
    %106 = vmatpush1.msra.mxu0 0.0
    %107 = vmatprep.subr.mxu0 0.0
    %108 = vmatpush1.msra.mxu0 0.0
    %109 = vmatprep.subr.mxu0 0.0
    %110 = vmatpush1.msra.mxu0 0.0
    %111 = vmatprep.subr.mxu0 0.0
    %112 = vmatpush1.msra.mxu0 0.0
    %113 = vmatprep.subr.mxu0 0.0
    %114 = vmatpush1.msra.mxu0 0.0
    %115 = vmatprep.subr.mxu0 0.0
    %116 = vmatpush1.msra.mxu0 0.0
    %117 = vmatprep.subr.mxu0 0.0
    %118 = vmatpush1.msra.mxu0 0.0
    %119 = vmatprep.subr.mxu0 0.0
    %120 = vmatpush1.msra.mxu0 0.0
    %121 = vmatprep.subr.mxu0 0.0
    %122 = vmatpush1.msra.mxu0 0.0
    %123 = vmatprep.subr.mxu0 0.0
    %124 = vmatpush1.msra.mxu0 0.0
    %125 = vmatprep.subr.mxu0 0.0
    %126 = vmatpush1.msra.mxu0 0.0
    %127 = vmatprep.subr.mxu0 0.0
    %128 = vmatpush1.msra.mxu0 0.0
    %129 = vmatprep.subr.mxu0 0.0
    %130 = vmatpush1.msra.mxu0 0.0
    %131 = vmatprep.subr.mxu0 0.0
    %132 = vmatpush1.msra.mxu0 0.0
    %133 = vmatprep.subr.mxu0 0.0
    %134 = vmatpush1.msra.mxu0 0.0
    %135 = vmatprep.subr.mxu0 0.0
    %136 = vmatpush1.msra.mxu0 0.0
    %137 = vmatprep.subr.mxu0 0.0
    %138 = vmatpush1.msra.mxu0 0.0
    %139 = vmatprep.subr.mxu0 0.0
    %140 = vmatpush1.msra.mxu0 0.0
    %141 = vmatprep.subr.mxu0 0.0
    %142 = vmatpush1.msra.mxu0 0.0
    %143 = vmatprep.subr.mxu0 0.0
    %144 = vmatpush1.msra.mxu0 0.0
    %145 = vmatprep.mubr.f32.mxu0 0.0
    %146 = vmatmul.mubr.f32.gmra.mrb[0].mxu0 %v79
    %v147 = vpop.f32.mrb[0].mxu0
    %v148 = vadd.f32 %v75, %v147
    %v149 = vpop.f32.mrb[0].mxu0
    %150 = vdwg.mxu0
    %v151 = vmax.f32 %v148, 0.0
    %v152 = vld [vmem:[#allocation2] sm:$0xff]
    %v153 = vld [vmem:[#allocation8] sm:$0xff]
    %v154 = vld [vmem:[#allocation8 + $0x8] sm:$0xff]
    %v155 = vld [vmem:[#allocation8 + $0x10] sm:$0xff]
    %v156 = vld [vmem:[#allocation8 + $0x18] sm:$0xff]
    %v157 = vld [vmem:[#allocation8 + $0x20] sm:$0xff]
    %v158 = vld [vmem:[#allocation8 + $0x28] sm:$0xff]
    %v159 = vld [vmem:[#allocation8 + $0x30] sm:$0xff]
    %v160 = vld [vmem:[#allocation8 + $0x38] sm:$0xff]
    %v161 = vld [vmem:[#allocation8 + $0x40] sm:$0xff]
    %v162 = vld [vmem:[#allocation8 + $0x48] sm:$0xff]
    %v163 = vld [vmem:[#allocation8 + $0x50] sm:$0xff]
    %v164 = vld [vmem:[#allocation8 + $0x58] sm:$0xff]
    %v165 = vld [vmem:[#allocation8 + $0x60] sm:$0xff]
    %v166 = vld [vmem:[#allocation8 + $0x68] sm:$0xff]
    %v167 = vld [vmem:[#allocation8 + $0x70] sm:$0xff]
    %v168 = vld [vmem:[#allocation8 + $0x78] sm:$0xff]
    %169 = vmatprep.subr.mxu0 0.0
    %170 = vmatpush1.msra.mxu0 %v153
    %171 = vmatprep.subr.mxu0 0.0
    %172 = vmatpush1.msra.mxu0 %v154
    %173 = vmatprep.subr.mxu0 0.0
    %174 = vmatpush1.msra.mxu0 %v155
    %175 = vmatprep.subr.mxu0 0.0
    %176 = vmatpush1.msra.mxu0 %v156
    %177 = vmatprep.subr.mxu0 0.0
    %178 = vmatpush1.msra.mxu0 %v157
    %179 = vmatprep.subr.mxu0 0.0
    %180 = vmatpush1.msra.mxu0 %v158
    %181 = vmatprep.subr.mxu0 0.0
    %182 = vmatpush1.msra.mxu0 %v159
    %183 = vmatprep.subr.mxu0 0.0
    %184 = vmatpush1.msra.mxu0 %v160
    %185 = vmatprep.subr.mxu0 0.0
    %186 = vmatpush1.msra.mxu0 %v161
    %187 = vmatprep.subr.mxu0 0.0
    %188 = vmatpush1.msra.mxu0 %v162
    %189 = vmatprep.subr.mxu0 0.0
    %190 = vmatpush1.msra.mxu0 %v163
    %191 = vmatprep.subr.mxu0 0.0
    %192 = vmatpush1.msra.mxu0 %v164
    %193 = vmatprep.subr.mxu0 0.0
    %194 = vmatpush1.msra.mxu0 %v165
    %195 = vmatprep.subr.mxu0 0.0
    %196 = vmatpush1.msra.mxu0 %v166
    %197 = vmatprep.subr.mxu0 0.0
    %198 = vmatpush1.msra.mxu0 %v167
    %199 = vmatprep.subr.mxu0 0.0
    %200 = vmatpush1.msra.mxu0 %v168
    %201 = vmatprep.subr.mxu0 0.0
    %202 = vmatpush1.msra.mxu0 0.0
    %203 = vmatprep.subr.mxu0 0.0
    %204 = vmatpush1.msra.mxu0 0.0
    %205 = vmatprep.subr.mxu0 0.0
    %206 = vmatpush1.msra.mxu0 0.0
    %207 = vmatprep.subr.mxu0 0.0
    %208 = vmatpush1.msra.mxu0 0.0
    %209 = vmatprep.subr.mxu0 0.0
    %210 = vmatpush1.msra.mxu0 0.0
    %211 = vmatprep.subr.mxu0 0.0
    %212 = vmatpush1.msra.mxu0 0.0
    %213 = vmatprep.subr.mxu0 0.0
    %214 = vmatpush1.msra.mxu0 0.0
    %215 = vmatprep.subr.mxu0 0.0
    %216 = vmatpush1.msra.mxu0 0.0
    %217 = vmatprep.subr.mxu0 0.0
    %218 = vmatpush1.msra.mxu0 0.0
    %219 = vmatprep.subr.mxu0 0.0
    %220 = vmatpush1.msra.mxu0 0.0
    %221 = vmatprep.subr.mxu0 0.0
    %222 = vmatpush1.msra.mxu0 0.0
    %223 = vmatprep.subr.mxu0 0.0
    %224 = vmatpush1.msra.mxu0 0.0
    %225 = vmatprep.subr.mxu0 0.0
    %226 = vmatpush1.msra.mxu0 0.0
    %227 = vmatprep.subr.mxu0 0.0
    %228 = vmatpush1.msra.mxu0 0.0
    %229 = vmatprep.subr.mxu0 0.0
    %230 = vmatpush1.msra.mxu0 0.0
    %231 = vmatprep.subr.mxu0 0.0
    %232 = vmatpush1.msra.mxu0 0.0
    %233 = vmatprep.mubr.f32.mxu0 0.0
    %234 = vmatmul.mubr.f32.gmra.mrb[0].mxu0 %v151
    %v235 = vpop.f32.mrb[0].mxu0
    %v236 = vadd.f32 0.0, %v235
    %v237 = vpop.f32.mrb[0].mxu0
    %238 = vdwg.mxu0
    %v239 = vadd.f32 %v152, %v236
    %240 = vst [vmem:[#allocation2] sm:$0xff] %v239
    // Predicated region
    $region38: #{_dnn_forward_impl.1} parent=1 // pred_check
      %p241 = pneg %p60
    $region39: #{_dnn_forward_impl.1} parent=1 // pred_check_branch
      %243 = sbr.rel (%p241) target = $region41
    $region40: #{_dnn_forward_impl.1} parent=1 // pred_region
      %v244 = vld [vmem:[#allocation2] sm:$0xff]
      %v245 = vld [vmem:[%s4] sm:$0x1]
      %v247 = vlaneseq
      %v248 = vshrl.u32 %v247, 7
      %v249 = vsub.s32 0, %v248
      %v250 = vrot.slane %v245, %v249
      %v252 = vadd.f32 %v244, %v250
      %253 = vst [vmem:[#allocation9] sm:$0xff] %v252
    $region41: #{_dnn_forward_impl.1} parent=1 // pred_fallthru
      _
    // Predicated region
    $region42: #{_dnn_forward_impl.1} parent=1 // pred_check
      _
    $region43: #{_dnn_forward_impl.1} parent=1 // pred_check_branch
      %255 = sbr.rel (0) target = $region45
    $region44: #{_dnn_forward_impl.1} parent=1 // pred_region
      %s257 = ssub.s32 128, 128
      %258 = vsyncadd [#allocation5], %s257
      %s260 = sshll.u32 [#allocation9], 4
      %s261 = int_to_ptr.vmem [resolvable:$true] %s260
      %263 = dma.vmem_to_hbm [thread:$0]  %s261, 128, %s5, [#allocation5]
    $region45: #{_dnn_forward_impl.1} parent=1 // pred_fallthru
      _
    // Predicated region
    $region46: #{_dnn_forward_impl.1} parent=1 // pred_check
      _
    $region47: #{_dnn_forward_impl.1} parent=1 // pred_check_branch
      %265 = sbr.rel (0) target = $region49
    $region48: #{_dnn_forward_impl.1} parent=1 // pred_region
      %266 = dma.done [#allocation5], 128
    $region49: #{_dnn_forward_impl.1} parent=1 // pred_fallthru
      _
    %267 = vsyncpa [#allocation4], 1
    %268 = vsyncpa [#allocation7], 1
    %269 = vsyncpa [#allocation5], 1

// kernel: _dnn_forward_impl.1
$region0: #{_dnn_forward_impl.1}
  #allocation0 [shape = 'u32[]', space=smem, size = 0x4, offset = 0x4, fixed_abs, tag = 'smem constant byte address 0x4 - core index']
  #allocation1 [shape = 'u32[144,128]{1,0:T(1,128)}', space=vmem, size = 0x12000, scoped, tag = 'internal scratch']
  #allocation2 [shape = 'f32[8,128]{1,0:T(8,128)}', space=vmem, size = 0x1000, scoped, tag = 'scratch operand']
  %s0 = inlined_call_operand.hbm [shape: f32[8,32], index: 0, kind: input, shape index: {}]
  %s1 = inlined_call_operand.hbm [shape: f32[32,128], index: 1, kind: input, shape index: {}]
  %s2 = inlined_call_operand.vmem [shape: f32[1,128], index: 2, kind: input, shape index: {}]
  %s3 = inlined_call_operand.hbm [shape: f32[128,128], index: 3, kind: input, shape index: {}]
  %s4 = inlined_call_operand.vmem [shape: f32[1,128], index: 4, kind: input, shape index: {}]
  %s5 = inlined_call_operand.hbm [shape: f32[8,128], index: 5, kind: output, shape index: {}]
  %s6 = sld [smem:[#allocation0]]
  $region50: #{_dnn_forward_impl.1} parent=0
    _
  %s8 = ssub.s32 1, %s6
  %s9 = scalar_select 0, %s8, %s6
  $region1: #{_dnn_forward_impl.1} parent=0
    #allocation3 [shape = 'u8[4096]{0}', space=vmem, size = 0x1000, scoped, tag = 'input window, operand 0, single buffered']
    #allocation4 [shape = 's32[1]{0}', space=sflag, size = 0x4, scoped, tag = 'scoped memory for _dnn_forward_impl.1']
    #allocation5 [shape = 's32[1]{0}', space=sflag, size = 0x4, scoped, tag = 'scoped memory for _dnn_forward_impl.1']
    #allocation6 [shape = 'u8[16384]{0}', space=vmem, size = 0x4000, scoped, tag = 'input window, operand 1, single buffered']
    #allocation7 [shape = 's32[1]{0}', space=sflag, size = 0x4, scoped, tag = 'scoped memory for _dnn_forward_impl.1']
    #allocation8 [shape = 'u8[65536]{0}', space=vmem, size = 0x10000, scoped, tag = 'input window, operand 3, single buffered']
    #allocation9 [shape = 'u8[4096]{0}', space=vmem, size = 0x1000, scoped, tag = 'output window, operand 0, single buffered']
    %10 = vsyncpa [#allocation4], 0
    %11 = vsyncpa [#allocation7], 0
    %12 = vsyncpa [#allocation5], 0
    // Predicated region
    $region2: #{_dnn_forward_impl.1} parent=1 // pred_check
      _
    $region3: #{_dnn_forward_impl.1} parent=1 // pred_check_branch
      %14 = sbr.rel (0) target = $region5
    $region4: #{_dnn_forward_impl.1} parent=1 // pred_region
      %s16 = ssub.s32 128, 128
      %17 = vsyncadd [#allocation4], %s16
      %s19 = sshll.u32 [#allocation3], 4
      %s20 = int_to_ptr.vmem [resolvable:$true] %s19
      %22 = dma.hbm_to_vmem [thread:$0]  %s0, 128, %s20, [#allocation4]
    $region5: #{_dnn_forward_impl.1} parent=1 // pred_fallthru
      _
    // Predicated region
    $region6: #{_dnn_forward_impl.1} parent=1 // pred_check
      _
    $region7: #{_dnn_forward_impl.1} parent=1 // pred_check_branch
      %24 = sbr.rel (0) target = $region9
    $region8: #{_dnn_forward_impl.1} parent=1 // pred_region
      %s26 = ssub.s32 512, 512
      %27 = vsyncadd [#allocation7], %s26
      %s28 = sshll.u32 [#allocation6], 4
      %s29 = int_to_ptr.vmem [resolvable:$true] %s28
      %34 = dma.hbm_to_vmem [thread:$0]  %s1, 512, %s29, [#allocation7], 128, 128, 8
    $region9: #{_dnn_forward_impl.1} parent=1 // pred_fallthru
      _
    // Predicated region
    $region10: #{_dnn_forward_impl.1} parent=1 // pred_check
      _
    $region11: #{_dnn_forward_impl.1} parent=1 // pred_check_branch
      %36 = sbr.rel (0) target = $region13
    $region12: #{_dnn_forward_impl.1} parent=1 // pred_region
      _
    $region13: #{_dnn_forward_impl.1} parent=1 // pred_fallthru
      _
    // Predicated region
    $region14: #{_dnn_forward_impl.1} parent=1 // pred_check
      _
    $region15: #{_dnn_forward_impl.1} parent=1 // pred_check_branch
      %38 = sbr.rel (0) target = $region17
    $region16: #{_dnn_forward_impl.1} parent=1 // pred_region
      %s40 = ssub.s32 2048, 2048
      %41 = vsyncadd [#allocation7], %s40
      %s42 = sshll.u32 [#allocation8], 4
      %s43 = int_to_ptr.vmem [resolvable:$true] %s42
      %48 = dma.hbm_to_vmem [thread:$0]  %s3, 2048, %s43, [#allocation7], 128, 128, 8
    $region17: #{_dnn_forward_impl.1} parent=1 // pred_fallthru
      _
    // Predicated region
    $region18: #{_dnn_forward_impl.1} parent=1 // pred_check
      _
    $region19: #{_dnn_forward_impl.1} parent=1 // pred_check_branch
      %50 = sbr.rel (0) target = $region21
    $region20: #{_dnn_forward_impl.1} parent=1 // pred_region
      _
    $region21: #{_dnn_forward_impl.1} parent=1 // pred_fallthru
      _
    // Predicated region
    $region22: #{_dnn_forward_impl.1} parent=1 // pred_check
      _
    $region23: #{_dnn_forward_impl.1} parent=1 // pred_check_branch
      %52 = sbr.rel (0) target = $region25
    $region24: #{_dnn_forward_impl.1} parent=1 // pred_region
      %53 = dma.done [#allocation4], 128
    $region25: #{_dnn_forward_impl.1} parent=1 // pred_fallthru
      _
    // Predicated region
    $region26: #{_dnn_forward_impl.1} parent=1 // pred_check
      _
    $region27: #{_dnn_forward_impl.1} parent=1 // pred_check_branch
      %55 = sbr.rel (0) target = $region29
    $region28: #{_dnn_forward_impl.1} parent=1 // pred_region
      %56 = dma.done [#allocation7], 512
    $region29: #{_dnn_forward_impl.1} parent=1 // pred_fallthru
      _
    // Predicated region
    $region30: #{_dnn_forward_impl.1} parent=1 // pred_check
      _
    $region31: #{_dnn_forward_impl.1} parent=1 // pred_check_branch
      %58 = sbr.rel (0) target = $region33
    $region32: #{_dnn_forward_impl.1} parent=1 // pred_region
      %59 = dma.done [#allocation7], 2048
    $region33: #{_dnn_forward_impl.1} parent=1 // pred_fallthru
      _
    %p60 = scmp.eq.s32.totalorder 0, 0
    // Predicated region
    $region34: #{_dnn_forward_impl.1} parent=1 // pred_check
      %p61 = pneg %p60
    $region35: #{_dnn_forward_impl.1} parent=1 // pred_check_branch
      %63 = sbr.rel (%p61) target = $region37
    $region36: #{_dnn_forward_impl.1} parent=1 // pred_region
      %64 = vst [vmem:[#allocation2] sm:$0xff] 0.0
    $region37: #{_dnn_forward_impl.1} parent=1 // pred_fallthru
      _
    %v65 = vld [vmem:[#allocation3] sm:$0xff]
    %v66 = vld [vmem:[#allocation6] sm:$0xff]
    %v67 = vld [vmem:[#allocation6 + $0x8] sm:$0xff]
    %v68 = vld [vmem:[#allocation6 + $0x10] sm:$0xff]
    %v69 = vld [vmem:[#allocation6 + $0x18] sm:$0xff]
    %v70 = vld [vmem:[%s2] sm:$0x1]
    %v72 = vlaneseq
    %v73 = vshrl.u32 %v72, 7
    %v74 = vsub.s32 0, %v73
    %v75 = vrot.slane %v70, %v74
    %vm77 = vcmask 261120
    %v79 = vsel %vm77, %v65, 0
    %81 = vmatprep.subr.mxu0 0.0
    %82 = vmatpush1.msra.mxu0 %v66
    %83 = vmatprep.subr.mxu0 0.0
    %84 = vmatpush1.msra.mxu0 %v67
    %85 = vmatprep.subr.mxu0 0.0
    %86 = vmatpush1.msra.mxu0 %v68
    %87 = vmatprep.subr.mxu0 0.0
    %88 = vmatpush1.msra.mxu0 %v69
    %89 = vmatprep.subr.mxu0 0.0
    %90 = vmatpush1.msra.mxu0 0.0
    %91 = vmatprep.subr.mxu0 0.0
    %92 = vmatpush1.msra.mxu0 0.0
    %93 = vmatprep.subr.mxu0 0.0
    %94 = vmatpush1.msra.mxu0 0.0
    %95 = vmatprep.subr.mxu0 0.0
    %96 = vmatpush1.msra.mxu0 0.0
    %97 = vmatprep.subr.mxu0 0.0
    %98 = vmatpush1.msra.mxu0 0.0
    %99 = vmatprep.subr.mxu0 0.0
    %100 = vmatpush1.msra.mxu0 0.0
    %101 = vmatprep.subr.mxu0 0.0
    %102 = vmatpush1.msra.mxu0 0.0
    %103 = vmatprep.subr.mxu0 0.0
    %104 = vmatpush1.msra.mxu0 0.0
    %105 = vmatprep.subr.mxu0 0.0
    %106 = vmatpush1.msra.mxu0 0.0
    %107 = vmatprep.subr.mxu0 0.0
    %108 = vmatpush1.msra.mxu0 0.0
    %109 = vmatprep.subr.mxu0 0.0
    %110 = vmatpush1.msra.mxu0 0.0
    %111 = vmatprep.subr.mxu0 0.0
    %112 = vmatpush1.msra.mxu0 0.0
    %113 = vmatprep.subr.mxu0 0.0
    %114 = vmatpush1.msra.mxu0 0.0
    %115 = vmatprep.subr.mxu0 0.0
    %116 = vmatpush1.msra.mxu0 0.0
    %117 = vmatprep.subr.mxu0 0.0
    %118 = vmatpush1.msra.mxu0 0.0
    %119 = vmatprep.subr.mxu0 0.0
    %120 = vmatpush1.msra.mxu0 0.0
    %121 = vmatprep.subr.mxu0 0.0
    %122 = vmatpush1.msra.mxu0 0.0
    %123 = vmatprep.subr.mxu0 0.0
    %124 = vmatpush1.msra.mxu0 0.0
    %125 = vmatprep.subr.mxu0 0.0
    %126 = vmatpush1.msra.mxu0 0.0
    %127 = vmatprep.subr.mxu0 0.0
    %128 = vmatpush1.msra.mxu0 0.0
    %129 = vmatprep.subr.mxu0 0.0
    %130 = vmatpush1.msra.mxu0 0.0
    %131 = vmatprep.subr.mxu0 0.0
    %132 = vmatpush1.msra.mxu0 0.0
    %133 = vmatprep.subr.mxu0 0.0
    %134 = vmatpush1.msra.mxu0 0.0
    %135 = vmatprep.subr.mxu0 0.0
    %136 = vmatpush1.msra.mxu0 0.0
    %137 = vmatprep.subr.mxu0 0.0
    %138 = vmatpush1.msra.mxu0 0.0
    %139 = vmatprep.subr.mxu0 0.0
    %140 = vmatpush1.msra.mxu0 0.0
    %141 = vmatprep.subr.mxu0 0.0
    %142 = vmatpush1.msra.mxu0 0.0
    %143 = vmatprep.subr.mxu0 0.0
    %144 = vmatpush1.msra.mxu0 0.0
    %145 = vmatprep.mubr.f32.mxu0 0.0
    %146 = vmatmul.mubr.f32.gmra.mrb[0].mxu0 %v79
    %v147 = vpop.f32.mrb[0].mxu0
    %v148 = vadd.f32 %v75, %v147
    %v149 = vpop.f32.mrb[0].mxu0
    %150 = vdwg.mxu0
    %v151 = vmax.f32 %v148, 0.0
    %v152 = vld [vmem:[#allocation2] sm:$0xff]
    %v153 = vld [vmem:[#allocation8] sm:$0xff]
    %v154 = vld [vmem:[#allocation8 + $0x8] sm:$0xff]
    %v155 = vld [vmem:[#allocation8 + $0x10] sm:$0xff]
    %v156 = vld [vmem:[#allocation8 + $0x18] sm:$0xff]
    %v157 = vld [vmem:[#allocation8 + $0x20] sm:$0xff]
    %v158 = vld [vmem:[#allocation8 + $0x28] sm:$0xff]
    %v159 = vld [vmem:[#allocation8 + $0x30] sm:$0xff]
    %v160 = vld [vmem:[#allocation8 + $0x38] sm:$0xff]
    %v161 = vld [vmem:[#allocation8 + $0x40] sm:$0xff]
    %v162 = vld [vmem:[#allocation8 + $0x48] sm:$0xff]
    %v163 = vld [vmem:[#allocation8 + $0x50] sm:$0xff]
    %v164 = vld [vmem:[#allocation8 + $0x58] sm:$0xff]
    %v165 = vld [vmem:[#allocation8 + $0x60] sm:$0xff]
    %v166 = vld [vmem:[#allocation8 + $0x68] sm:$0xff]
    %v167 = vld [vmem:[#allocation8 + $0x70] sm:$0xff]
    %v168 = vld [vmem:[#allocation8 + $0x78] sm:$0xff]
    %169 = vmatprep.subr.mxu0 0.0
    %170 = vmatpush1.msra.mxu0 %v153
    %171 = vmatprep.subr.mxu0 0.0
    %172 = vmatpush1.msra.mxu0 %v154
    %173 = vmatprep.subr.mxu0 0.0
    %174 = vmatpush1.msra.mxu0 %v155
    %175 = vmatprep.subr.mxu0 0.0
    %176 = vmatpush1.msra.mxu0 %v156
    %177 = vmatprep.subr.mxu0 0.0
    %178 = vmatpush1.msra.mxu0 %v157
    %179 = vmatprep.subr.mxu0 0.0
    %180 = vmatpush1.msra.mxu0 %v158
    %181 = vmatprep.subr.mxu0 0.0
    %182 = vmatpush1.msra.mxu0 %v159
    %183 = vmatprep.subr.mxu0 0.0
    %184 = vmatpush1.msra.mxu0 %v160
    %185 = vmatprep.subr.mxu0 0.0
    %186 = vmatpush1.msra.mxu0 %v161
    %187 = vmatprep.subr.mxu0 0.0
    %188 = vmatpush1.msra.mxu0 %v162
    %189 = vmatprep.subr.mxu0 0.0
    %190 = vmatpush1.msra.mxu0 %v163
    %191 = vmatprep.subr.mxu0 0.0
    %192 = vmatpush1.msra.mxu0 %v164
    %193 = vmatprep.subr.mxu0 0.0
    %194 = vmatpush1.msra.mxu0 %v165
    %195 = vmatprep.subr.mxu0 0.0
    %196 = vmatpush1.msra.mxu0 %v166
    %197 = vmatprep.subr.mxu0 0.0
    %198 = vmatpush1.msra.mxu0 %v167
    %199 = vmatprep.subr.mxu0 0.0
    %200 = vmatpush1.msra.mxu0 %v168
    %201 = vmatprep.subr.mxu0 0.0
    %202 = vmatpush1.msra.mxu0 0.0
    %203 = vmatprep.subr.mxu0 0.0
    %204 = vmatpush1.msra.mxu0 0.0
    %205 = vmatprep.subr.mxu0 0.0
    %206 = vmatpush1.msra.mxu0 0.0
    %207 = vmatprep.subr.mxu0 0.0
    %208 = vmatpush1.msra.mxu0 0.0
    %209 = vmatprep.subr.mxu0 0.0
    %210 = vmatpush1.msra.mxu0 0.0
    %211 = vmatprep.subr.mxu0 0.0
    %212 = vmatpush1.msra.mxu0 0.0
    %213 = vmatprep.subr.mxu0 0.0
    %214 = vmatpush1.msra.mxu0 0.0
    %215 = vmatprep.subr.mxu0 0.0
    %216 = vmatpush1.msra.mxu0 0.0
    %217 = vmatprep.subr.mxu0 0.0
    %218 = vmatpush1.msra.mxu0 0.0
    %219 = vmatprep.subr.mxu0 0.0
    %220 = vmatpush1.msra.mxu0 0.0
    %221 = vmatprep.subr.mxu0 0.0
    %222 = vmatpush1.msra.mxu0 0.0
    %223 = vmatprep.subr.mxu0 0.0
    %224 = vmatpush1.msra.mxu0 0.0
    %225 = vmatprep.subr.mxu0 0.0
    %226 = vmatpush1.msra.mxu0 0.0
    %227 = vmatprep.subr.mxu0 0.0
    %228 = vmatpush1.msra.mxu0 0.0
    %229 = vmatprep.subr.mxu0 0.0
    %230 = vmatpush1.msra.mxu0 0.0
    %231 = vmatprep.subr.mxu0 0.0
    %232 = vmatpush1.msra.mxu0 0.0
    %233 = vmatprep.mubr.f32.mxu0 0.0
    %234 = vmatmul.mubr.f32.gmra.mrb[0].mxu0 %v151
    %v235 = vpop.f32.mrb[0].mxu0
    %v236 = vadd.f32 0.0, %v235
    %v237 = vpop.f32.mrb[0].mxu0
    %238 = vdwg.mxu0
    %v239 = vadd.f32 %v152, %v236
    %240 = vst [vmem:[#allocation2] sm:$0xff] %v239
    // Predicated region
    $region38: #{_dnn_forward_impl.1} parent=1 // pred_check
      %p241 = pneg %p60
    $region39: #{_dnn_forward_impl.1} parent=1 // pred_check_branch
      %243 = sbr.rel (%p241) target = $region41
    $region40: #{_dnn_forward_impl.1} parent=1 // pred_region
      %v244 = vld [vmem:[#allocation2] sm:$0xff]
      %v245 = vld [vmem:[%s4] sm:$0x1]
      %v247 = vlaneseq
      %v248 = vshrl.u32 %v247, 7
      %v249 = vsub.s32 0, %v248
      %v250 = vrot.slane %v245, %v249
      %v252 = vadd.f32 %v244, %v250
      %253 = vst [vmem:[#allocation9] sm:$0xff] %v252
    $region41: #{_dnn_forward_impl.1} parent=1 // pred_fallthru
      _
    // Predicated region
    $region42: #{_dnn_forward_impl.1} parent=1 // pred_check
      _
    $region43: #{_dnn_forward_impl.1} parent=1 // pred_check_branch
      %255 = sbr.rel (0) target = $region45
    $region44: #{_dnn_forward_impl.1} parent=1 // pred_region
      %s257 = ssub.s32 128, 128
      %258 = vsyncadd [#allocation5], %s257
      %s260 = sshll.u32 [#allocation9], 4
      %s261 = int_to_ptr.vmem [resolvable:$true] %s260
      %263 = dma.vmem_to_hbm [thread:$0]  %s261, 128, %s5, [#allocation5]
    $region45: #{_dnn_forward_impl.1} parent=1 // pred_fallthru
      _
    // Predicated region
    $region46: #{_dnn_forward_impl.1} parent=1 // pred_check
      _
    $region47: #{_dnn_forward_impl.1} parent=1 // pred_check_branch
      %265 = sbr.rel (0) target = $region49
    $region48: #{_dnn_forward_impl.1} parent=1 // pred_region
      %266 = dma.done [#allocation5], 128
    $region49: #{_dnn_forward_impl.1} parent=1 // pred_fallthru
      _
    %267 = vsyncpa [#allocation4], 1
    %268 = vsyncpa [#allocation7], 1
    %269 = vsyncpa [#allocation5], 1

</llo_original>
